<compile_context>
chip_gen: v7x
topology: tpu7x:2x2x1
jax: 0.10.0
libtpu: 0.0.40
codegen_flags: <defaults>
</compile_context>

<pallas_src>
import functools

import jax
import jax.numpy as jnp
from jax.experimental import pallas as pl
from jax.experimental.pallas import tpu as pltpu


def _round_up(x, m):
    return ((x + m - 1) // m) * m


def _sine_layer_kernel(x_ref, w_ref, b_ref, o_ref, *, omega_0):
    # x_ref : (tm, K)    activations tile
    # w_ref : (tn, K)    weight tile in native (out, in) layout
    # b_ref : (1, tn)    bias tile (f32)
    # o_ref : (tm, tn)   output tile
    acc = jax.lax.dot_general(
        x_ref[...], w_ref[...],
        dimension_numbers=(((1,), (1,)), ((), ())),   # contract K with K
        preferred_element_type=jnp.float32)
    acc = acc + b_ref[...]
    # NOTE: the omega_0 scale is one VPU mul per element and is expected to be
    # free filler next to the sin() polynomial; fold omega_0 into W/b in the
    # wrapper only if a bundle dump shows the VALU slot is the bottleneck.
    o_ref[...] = jnp.sin(omega_0 * acc).astype(o_ref.dtype)


# Tile-sizing budget and scoped-VMEM limit, conservative across v5e/v6e/v7x
# (v7x: 64 MiB physical; v5e scoped default is only 16 MiB so we raise it).
_VMEM_TILE_BUDGET = 24 * 1024 * 1024
_VMEM_LIMIT_BYTES = 32 * 1024 * 1024


def sine_layer(x, weight, bias, omega_0=30.0, *, use_bf16_matmul=False,
               tm=None, tn=None):
    """Pallas implementation of SineLayer.forward.

    x:      (..., in_features)
    weight: (out_features, in_features)
    bias:   (out_features,)
    """
    out_features, in_features = weight.shape
    lead_shape = x.shape[:-1]
    out_dtype = x.dtype

    x2 = x.reshape(-1, in_features)
    M, K = x2.shape
    N = out_features

    # --- small-K path (first SIREN layer, in_features = 2/3): pad K to 8 ----
    if K < 8:
        kp = 8 - K
        x2 = jnp.pad(x2, ((0, 0), (0, kp)))
        weight = jnp.pad(weight, ((0, 0), (0, kp)))
        K = 8
    # TODO(synk): for K==2/3 a pure-VPU broadcast-FMA path would avoid the MXU
    # entirely; the zero-padded MXU path is kept here for simplicity.

    # --- lane-dense output: pad out_features to a multiple of 128 ----------
    N_pad = _round_up(N, 128)
    if N_pad != N:
        weight = jnp.pad(weight, ((0, N_pad - N), (0, 0)))
        bias = jnp.pad(bias, (0, N_pad - N))
    b2 = bias.reshape(1, N_pad).astype(jnp.float32)

    # --- optional bf16 matmul inputs (f32 accumulate inside the kernel) -----
    mm_dtype = jnp.bfloat16 if use_bf16_matmul else x2.dtype
    x2 = x2.astype(mm_dtype)
    w = weight.astype(mm_dtype)
    in_bytes = jnp.dtype(mm_dtype).itemsize
    out_bytes = jnp.dtype(out_dtype).itemsize

    # --- tile sizes ---------------------------------------------------------
    if tn is None:
        tn = N_pad if N_pad <= 512 else 512
    else:
        tn = min(_round_up(max(tn, 128), 128), N_pad)
    single_n_tile = (tn == N_pad)

    if tm is None:
        tm = 8
        for cand in (2048, 1024, 512, 256, 128, 64, 32, 16, 8):
            footprint = 2 * (cand * K * in_bytes        # x tile (double buffered)
                             + tn * K * in_bytes        # weight tile
                             + tn * 4                   # bias tile
                             + cand * tn * out_bytes)   # output tile
            if footprint <= _VMEM_TILE_BUDGET:
                tm = cand
                break
        # Keep >= 2 row-steps when possible (megacore / v7x 2-TC sharding),
        # and don't allocate a tile far larger than M.
        tm = min(tm, max(8, _round_up(pl.cdiv(M, 2), 8)))
    else:
        tm = max(8, _round_up(tm, 8))

    # --- grid & specs --------------------------------------------------------
    if single_n_tile:
        # 1-D grid over rows; weight + bias stay resident in VMEM.
        grid = (pl.cdiv(M, tm),)
        in_specs = [
            pl.BlockSpec((tm, K), lambda i: (i, 0)),        # x tile
            pl.BlockSpec((N_pad, K), lambda i: (0, 0)),     # resident weight
            pl.BlockSpec((1, N_pad), lambda i: (0, 0)),     # resident bias
        ]
        out_spec = pl.BlockSpec((tm, N_pad), lambda i: (i, 0))
        dim_sem = ("parallel",)
    else:
        grid = (pl.cdiv(M, tm), pl.cdiv(N_pad, tn))
        in_specs = [
            pl.BlockSpec((tm, K), lambda i, j: (i, 0)),
            pl.BlockSpec((tn, K), lambda i, j: (j, 0)),
            pl.BlockSpec((1, tn), lambda i, j: (0, j)),
        ]
        out_spec = pl.BlockSpec((tm, tn), lambda i, j: (i, j))
        dim_sem = ("parallel", "parallel")

    out = pl.pallas_call(
        functools.partial(_sine_layer_kernel, omega_0=float(omega_0)),
        out_shape=jax.ShapeDtypeStruct((M, N_pad), out_dtype),
        grid_spec=pltpu.PrefetchScalarGridSpec(
            num_scalar_prefetch=0,
            grid=grid,
            in_specs=in_specs,
            out_specs=out_spec,
        ),
        compiler_params=pltpu.CompilerParams(
            dimension_semantics=dim_sem,
            vmem_limit_bytes=_VMEM_LIMIT_BYTES),
    )(x2, w, b2)

    if N_pad != N:
        out = out[:, :N]
    return out.reshape(*lead_shape, N)


def init_sine_layer_params(key, in_features, out_features, is_first=False,
                           omega_0=30.0):
    """Deterministic SIREN init (matches PyTorch SineLayer.init_weights)."""
    kw, kb = jax.random.split(key)
    if is_first:
        bound = 1.0 / in_features
    else:
        bound = float(jnp.sqrt(6.0 / in_features)) / omega_0
    weight = jax.random.uniform(
        kw, (out_features, in_features), jnp.float32, -bound, bound)
    # nn.Linear default bias init: U(-1/sqrt(in), 1/sqrt(in))
    b_bound = 1.0 / float(jnp.sqrt(in_features))
    bias = jax.random.uniform(
        kb, (out_features,), jnp.float32, -b_bound, b_bound)
    return weight, bias


def _reference(x, weight, bias, omega_0):
    # High-precision reference so the check isn't limited by XLA's default
    # (bf16) matmul precision on TPU.
    acc = jnp.dot(x, weight.T, precision=jax.lax.Precision.HIGHEST) + bias
    return jnp.sin(omega_0 * acc)


if __name__ == "__main__":
    key = jax.random.PRNGKey(0)
    k_x, k_p0, k_p1 = jax.random.split(key, 3)

    omega_0 = 30.0
    batch, seq = 2, 64
    in0, hidden = 2, 32          # first SIREN layer: 2-D coordinates -> hidden

    # First layer (exercises the small-K pad and the N->128 lane padding).
    coords = jax.random.uniform(k_x, (batch, seq, in0), jnp.float32, -1.0, 1.0)
    w0, b0 = init_sine_layer_params(k_p0, in0, hidden, is_first=True,
                                    omega_0=omega_0)
    y0 = sine_layer(coords, w0, b0, omega_0)
    jax.block_until_ready(y0)
    ref0 = _reference(coords, w0, b0, omega_0)
    assert y0.shape == (batch, seq, hidden)
    assert jnp.allclose(y0, ref0, atol=1e-4, rtol=1e-4), "layer-0 mismatch"

    # Hidden layer, f32 path.
    w1, b1 = init_sine_layer_params(k_p1, hidden, hidden, is_first=False,
                                    omega_0=omega_0)
    y1 = sine_layer(y0, w1, b1, omega_0)
    jax.block_until_ready(y1)
    ref1 = _reference(y0, w1, b1, omega_0)
    assert jnp.allclose(y1, ref1, atol=1e-4, rtol=1e-4), "layer-1 mismatch"

    # Hidden layer, bf16-matmul fast path (looser tolerance).
    y1_bf16 = sine_layer(y0, w1, b1, omega_0, use_bf16_matmul=True)
    jax.block_until_ready(y1_bf16)
    assert jnp.allclose(y1_bf16, ref1, atol=5e-2, rtol=5e-2), "bf16 mismatch"

    print("KERNEL_OK")
</pallas_src>

<mosaic_0001>
module attributes {stable_mosaic.version = 11 : i64} {
  func.func @_sine_layer_kernel(%arg0: i32, %arg1: memref<64x8xf32, #tpu.memory_space<vmem>>, %arg2: memref<128x8xf32, #tpu.memory_space<vmem>>, %arg3: memref<1x128xf32, #tpu.memory_space<vmem>>, %arg4: memref<64x128xf32, #tpu.memory_space<vmem>>) attributes {dimension_semantics = [#tpu.dimension_semantics<parallel>], iteration_bounds = array<i64: 2>, scalar_prefetch = 0 : i64, scratch_operands = 0 : i64, tpu.core_type = #tpu.core_type<tc>, window_params = [{transform_indices = @transform_0, window_bounds = array<i64: 64, 8>}, {pipeline_mode = #tpu.pipeline_mode<synchronous>, transform_indices = @transform_1, window_bounds = array<i64: 128, 8>}, {pipeline_mode = #tpu.pipeline_mode<synchronous>, transform_indices = @transform_2, window_bounds = array<i64: 1, 128>}, {transform_indices = @transform_3, window_bounds = array<i64: 64, 128>}]} {
    %c0 = arith.constant 0 : index
    %c0_0 = arith.constant 0 : index
    %0 = vector.load %arg1[%c0, %c0_0] : memref<64x8xf32, #tpu.memory_space<vmem>>, vector<64x8xf32>
    %c0_1 = arith.constant 0 : index
    %c0_2 = arith.constant 0 : index
    %1 = vector.load %arg2[%c0_1, %c0_2] : memref<128x8xf32, #tpu.memory_space<vmem>>, vector<128x8xf32>
    %cst = arith.constant dense<0.000000e+00> : vector<64x128xf32>
    %2 = tpu.matmul %0, %1, %cst {dimension_numbers = #tpu.dot_dimension_numbers<[1], [1], [0], [0], [0, 0, 1, 0], [], []>} : vector<64x8xf32>, vector<128x8xf32>, vector<64x128xf32> -> vector<64x128xf32>
    %c0_3 = arith.constant 0 : index
    %c0_4 = arith.constant 0 : index
    %3 = vector.load %arg3[%c0_3, %c0_4] : memref<1x128xf32, #tpu.memory_space<vmem>>, vector<1x128xf32>
    %4 = vector.broadcast %3 : vector<1x128xf32> to vector<64x128xf32>
    %5 = arith.addf %2, %4 : vector<64x128xf32>
    %cst_5 = arith.constant 3.000000e+01 : f32
    %6 = vector.broadcast %cst_5 : f32 to vector<64x128xf32>
    %7 = arith.mulf %6, %5 : vector<64x128xf32>
    %8 = math.sin %7 : vector<64x128xf32>
    %c0_6 = arith.constant 0 : index
    %c0_7 = arith.constant 0 : index
    %9 = vector.load %arg4[%c0_6, %c0_7] : memref<64x128xf32, #tpu.memory_space<vmem>>, vector<64x128xf32>
    tpu.vector_store %arg4[%c0_6, %c0_7], %8 {strides = array<i32>} : memref<64x128xf32, #tpu.memory_space<vmem>>, vector<64x128xf32>,
    return
  }
  func.func @transform_0(%arg0: i32) -> (i32, i32) {
    %c0_i32 = arith.constant 0 : i32
    %c0_i32_0 = arith.constant 0 : i32
    return %arg0, %c0_i32 : i32, i32
  }
  func.func @transform_1(%arg0: i32) -> (i32, i32) {
    %c0_i32 = arith.constant 0 : i32
    %c0_i32_0 = arith.constant 0 : i32
    %c0_i32_1 = arith.constant 0 : i32
    return %c0_i32, %c0_i32_0 : i32, i32
  }
  func.func @transform_2(%arg0: i32) -> (i32, i32) {
    %c0_i32 = arith.constant 0 : i32
    %c0_i32_0 = arith.constant 0 : i32
    %c0_i32_1 = arith.constant 0 : i32
    return %c0_i32, %c0_i32_0 : i32, i32
  }
  func.func @transform_3(%arg0: i32) -> (i32, i32) {
    %c0_i32 = arith.constant 0 : i32
    %c0_i32_0 = arith.constant 0 : i32
    return %arg0, %c0_i32 : i32, i32
  }
}

</mosaic_0001>

<llo_original>
// kernel: tpu_custom_call.1
$region0: #{tpu_custom_call.1}
  #allocation0 [shape = 'u32[]', space=smem, size = 0x4, offset = 0x4, fixed_abs, tag = 'smem constant byte address 0x4 - core index']
  #allocation1 [shape = 'u32[144,128]{1,0:T(1,128)}', space=vmem, size = 0x12000, scoped, tag = 'internal scratch']
  %s0 = inlined_call_operand.vmem [shape: f32[128,8], index: 0, kind: input, shape index: {}]
  %s1 = inlined_call_operand.vmem [shape: f32[128,8], index: 1, kind: input, shape index: {}]
  %s2 = inlined_call_operand.vmem [shape: f32[1,128], index: 2, kind: input, shape index: {}]
  %s3 = inlined_call_operand.hbm [shape: f32[128,128], index: 3, kind: output, shape index: {}]
  %s4 = sld [smem:[#allocation0]]
  $region45: #{tpu_custom_call.1} parent=0
    _
  %s6 = ssub.s32 1, %s4
  %s7 = scalar_select 0, %s6, %s4
  $region1: #{tpu_custom_call.1} parent=0
    #allocation2 [shape = 'u8[65536]{0}', space=vmem, size = 0x10000, scoped, tag = 'output window, operand 0']
    #allocation3 [shape = 's32[2]{0}', space=sflag, size = 0x8, scoped, tag = 'scoped memory for tpu_custom_call.1']
    %8 = vsyncpa [#allocation3], 0
    %s9 = scalar_lea.sflag [#allocation3], 1
    %10 = vsyncpa %s9, 0
    loop: start=0, step=1, limit=4
    $region2: #{tpu_custom_call.1} parent=1 // loop_pre_header
      _
    $region3: #{tpu_custom_call.1} parent=1 // loop_header
      %s12 = sphi 0, %s16
      %p13 = scmp.ge.s32.totalorder %s12, 4
      %s22 = sphi 0, %s24
      %s25 = sphi 0, %s22
      %s26 = sphi 0, %s25
      %s42 = sphi 0, %s26
      %s46 = sphi 0, %s46
      %s48 = sphi 0, %s46
      %s49 = sphi 0, %s48
      %s63 = sphi 0, %s49
      %s67 = sphi 0, %s67
      %s69 = sphi 0, %s67
      %s70 = sphi 0, %s69
      %s84 = sphi 0, %s70
      %s90 = sphi 0, %s92
      %s93 = sphi 0, %s90
      %s94 = sphi 0, %s93
      %s110 = sphi 0, %s94
    $region4: #{tpu_custom_call.1} parent=1 // loop_header_branch
      %15 = sbr.rel (%p13) target = $region8
    $region5: #{tpu_custom_call.1} parent=1 // loop_body
      %s17 = ssub.s32 %s12, 1
      %s18 = ssub.s32 %s12, 2
      %s19 = sadd.s32 %s12, 1
      %s20 = ssub.s32 %s12, %s19
      %p21 = scmp.eq.s32.totalorder %s20, 0
      %s23 = sadd.s32 %s22, 1
      %s24 = scalar_select %p21, %s22, %s23
      %p27 = pneg %p21
      %p28 = scmp.eq.s32.totalorder %s12, 1
      %p29 = por %p27, %p28
      %p30 = scmp.ne.s32.totalorder %s22, %s25
      %p31 = scmp.eq.s32.totalorder %s12, 0
      %p32 = por %p30, %p31
      %p33 = scmp.ne.s32.totalorder %s22, %s25
      %p34 = scmp.eq.s32.totalorder %s17, 1
      %p35 = por %p33, %p34
      %p36 = scmp.ne.s32.totalorder %s25, %s26
      %p37 = scmp.eq.s32.totalorder %s17, 0
      %p38 = por %p36, %p37
      %p39 = scmp.ne.s32.totalorder %s25, %s26
      %p40 = scmp.eq.s32.totalorder %s18, 1
      %p41 = por %p39, %p40
      %p43 = scmp.ne.s32.totalorder %s26, %s42
      %p44 = scmp.eq.s32.totalorder %s18, 0
      %p45 = por %p43, %p44
      %s47 = sadd.s32 %s46, 1
      %p50 = scmp.eq.s32.totalorder %s12, 1
      %p51 = scmp.ne.s32.totalorder %s46, %s48
      %p52 = scmp.eq.s32.totalorder %s12, 0
      %p53 = por %p51, %p52
      %p54 = scmp.ne.s32.totalorder %s46, %s48
      %p55 = scmp.eq.s32.totalorder %s17, 1
      %p56 = por %p54, %p55
      %p57 = scmp.ne.s32.totalorder %s48, %s49
      %p58 = scmp.eq.s32.totalorder %s17, 0
      %p59 = por %p57, %p58
      %p60 = scmp.ne.s32.totalorder %s48, %s49
      %p61 = scmp.eq.s32.totalorder %s18, 1
      %p62 = por %p60, %p61
      %p64 = scmp.ne.s32.totalorder %s49, %s63
      %p65 = scmp.eq.s32.totalorder %s18, 0
      %p66 = por %p64, %p65
      %s68 = sadd.s32 %s67, 1
      %p71 = scmp.eq.s32.totalorder %s12, 1
      %p72 = scmp.ne.s32.totalorder %s67, %s69
      %p73 = scmp.eq.s32.totalorder %s12, 0
      %p74 = por %p72, %p73
      %p75 = scmp.ne.s32.totalorder %s67, %s69
      %p76 = scmp.eq.s32.totalorder %s17, 1
      %p77 = por %p75, %p76
      %p78 = scmp.ne.s32.totalorder %s69, %s70
      %p79 = scmp.eq.s32.totalorder %s17, 0
      %p80 = por %p78, %p79
      %p81 = scmp.ne.s32.totalorder %s69, %s70
      %p82 = scmp.eq.s32.totalorder %s18, 1
      %p83 = por %p81, %p82
      %p85 = scmp.ne.s32.totalorder %s70, %s84
      %p86 = scmp.eq.s32.totalorder %s18, 0
      %p87 = por %p85, %p86
      %s88 = ssub.s32 %s12, %s19
      %p89 = scmp.eq.s32.totalorder %s88, 0
      %s91 = sadd.s32 %s90, 1
      %s92 = scalar_select %p89, %s90, %s91
      %p95 = pneg %p89
      %p96 = scmp.eq.s32.totalorder %s12, 1
      %p97 = por %p95, %p96
      %p98 = scmp.ne.s32.totalorder %s90, %s93
      %p99 = scmp.eq.s32.totalorder %s12, 0
      %p100 = por %p98, %p99
      %p101 = scmp.ne.s32.totalorder %s90, %s93
      %p102 = scmp.eq.s32.totalorder %s17, 1
      %p103 = por %p101, %p102
      %p104 = scmp.ne.s32.totalorder %s93, %s94
      %p105 = scmp.eq.s32.totalorder %s17, 0
      %p106 = por %p104, %p105
      %p107 = scmp.ne.s32.totalorder %s93, %s94
      %p108 = scmp.eq.s32.totalorder %s18, 1
      %p109 = por %p107, %p108
      %p111 = scmp.ne.s32.totalorder %s94, %s110
      %p112 = scmp.eq.s32.totalorder %s18, 0
      %p113 = por %p111, %p112
      %p114 = scmp.le.s32.totalorder 1, %s12
      %p115 = scmp.lt.s32.totalorder %s12, 3
      %p116 = pnand %p114, %p115
      %p117 = pneg %p116
      // Predicated region
      $region9: #{tpu_custom_call.1} parent=5 // pred_check
        _
      $region10: #{tpu_custom_call.1} parent=5 // pred_check_branch
        %119 = sbr.rel (%p116) target = $region12
      $region11: #{tpu_custom_call.1} parent=5 // pred_region
        %s120 = ssub.s32 %s12, 1
        // Predicated region
        $region13: #{tpu_custom_call.1} parent=11 // pred_check
          %p121 = pneg %p59
        $region14: #{tpu_custom_call.1} parent=11 // pred_check_branch
          %123 = sbr.rel (%p121) target = $region16
        $region15: #{tpu_custom_call.1} parent=11 // pred_region
          _
        $region16: #{tpu_custom_call.1} parent=11 // pred_fallthru
          _
        // Predicated region
        $region17: #{tpu_custom_call.1} parent=11 // pred_check
          %p124 = pneg %p80
        $region18: #{tpu_custom_call.1} parent=11 // pred_check_branch
          %126 = sbr.rel (%p124) target = $region20
        $region19: #{tpu_custom_call.1} parent=11 // pred_region
          _
        $region20: #{tpu_custom_call.1} parent=11 // pred_fallthru
          _
      $region12: #{tpu_custom_call.1} parent=5 // pred_fallthru
        _
      %p127 = scmp.lt.s32.totalorder %s12, 2
      // Predicated region
      $region21: #{tpu_custom_call.1} parent=5 // pred_check
        %p128 = pneg %p127
      $region22: #{tpu_custom_call.1} parent=5 // pred_check_branch
        %130 = sbr.rel (%p128) target = $region24
      $region23: #{tpu_custom_call.1} parent=5 // pred_region
        // Predicated region
        $region25: #{tpu_custom_call.1} parent=23 // pred_check
          %p131 = pneg %p32
        $region26: #{tpu_custom_call.1} parent=23 // pred_check_branch
          %133 = sbr.rel (%p131) target = $region28
        $region27: #{tpu_custom_call.1} parent=23 // pred_region
          %s134 = smul.u32 8, %s12
          %p135 = scmp.lt.s32.totalorder %s134, 15
          %s136 = scalar_select %p135, %s134, 15
          %s137 = smul.addr %s136, 8
          %s138 = scalar_lea.vmem %s0, %s137
          %s139 = smul.u32 8, %s12
        $region28: #{tpu_custom_call.1} parent=23 // pred_fallthru
          _
      $region24: #{tpu_custom_call.1} parent=5 // pred_fallthru
        _
      %p140 = scmp.le.s32.totalorder 1, %s12
      %p141 = scmp.lt.s32.totalorder %s12, 3
      %p142 = pnand %p140, %p141
      %p143 = pneg %p142
      // Predicated region
      $region29: #{tpu_custom_call.1} parent=5 // pred_check
        _
      $region30: #{tpu_custom_call.1} parent=5 // pred_check_branch
        %145 = sbr.rel (%p142) target = $region32
      $region31: #{tpu_custom_call.1} parent=5 // pred_region
        %s146 = ssub.s32 %s12, 1
        %s147 = smul.u32 8, %s17
        %p148 = scmp.lt.s32.totalorder %s147, 15
        %s149 = scalar_select %p148, %s147, 15
        %s150 = smul.addr %s149, 8
        %s151 = scalar_lea.vmem %s0, %s150
        %p152 = pneg %p38
        %p153 = pneg %p35
        %p154 = pneg %p59
        %p155 = pneg %p56
        %p156 = pneg %p80
        %p157 = pneg %p77
        %p158 = pneg %p106
        %p159 = pneg %p103
        %s160 = sand.u32 %s93, 1
        %s161 = scalar_lea.sflag [#allocation3], %s160
        %s162 = sand.u32 %s93, 1
        %s163 = smul.addr %s162, 64
        %s164 = scalar_lea.vmem [#allocation2], %s163
        %s165 = smul.u32 8, %s17
        %p166 = scmp.lt.s32.totalorder %s165, 15
        %s167 = scalar_select %p166, %s165, 15
        %s168 = smul.addr %s167, 8
        %s169 = scalar_lea.vmem %s0, %s168
        %s170 = smul.u32 8, %s17
        %s171 = smul.u32 8, %s17
        %v172 = vld [vmem:[%s169] sm:$0xff]
        %v173 = vld [vmem:[%s169 + $0x8] sm:$0xff]
        %v174 = vld [vmem:[%s169 + $0x10] sm:$0xff]
        %v175 = vld [vmem:[%s169 + $0x18] sm:$0xff]
        %v176 = vld [vmem:[%s169 + $0x20] sm:$0xff]
        %v177 = vld [vmem:[%s169 + $0x28] sm:$0xff]
        %v178 = vld [vmem:[%s169 + $0x30] sm:$0xff]
        %v179 = vld [vmem:[%s169 + $0x38] sm:$0xff]
        %v180 = vld [vmem:[%s1] sm:$0xff]
        %v181 = vld [vmem:[%s1 + $0x8] sm:$0xff]
        %v182 = vld [vmem:[%s1 + $0x10] sm:$0xff]
        %v183 = vld [vmem:[%s1 + $0x18] sm:$0xff]
        %v184 = vld [vmem:[%s1 + $0x20] sm:$0xff]
        %v185 = vld [vmem:[%s1 + $0x28] sm:$0xff]
        %v186 = vld [vmem:[%s1 + $0x30] sm:$0xff]
        %v187 = vld [vmem:[%s1 + $0x38] sm:$0xff]
        %v188 = vld [vmem:[%s1 + $0x40] sm:$0xff]
        %v189 = vld [vmem:[%s1 + $0x48] sm:$0xff]
        %v190 = vld [vmem:[%s1 + $0x50] sm:$0xff]
        %v191 = vld [vmem:[%s1 + $0x58] sm:$0xff]
        %v192 = vld [vmem:[%s1 + $0x60] sm:$0xff]
        %v193 = vld [vmem:[%s1 + $0x68] sm:$0xff]
        %v194 = vld [vmem:[%s1 + $0x70] sm:$0xff]
        %v195 = vld [vmem:[%s1 + $0x78] sm:$0xff]
        %v196 = vld [vmem:[%s2] sm:$0x1]
        %v198 = vlaneseq
        %v199 = vshrl.u32 %v198, 7
        %v200 = vsub.s32 0, %v199
        %v201 = vrot.slane %v196, %v200
        %vm203 = vcmask 64512
        %v205 = vsel %vm203, %v172, 0
        %v208 = vsel %vm203, %v173, 0
        %v211 = vsel %vm203, %v174, 0
        %v214 = vsel %vm203, %v175, 0
        %v217 = vsel %vm203, %v176, 0
        %v220 = vsel %vm203, %v177, 0
        %v223 = vsel %vm203, %v178, 0
        %v226 = vsel %vm203, %v179, 0
        %v229 = vsel %vm203, %v180, 0
        %v232 = vsel %vm203, %v181, 0
        %v235 = vsel %vm203, %v182, 0
        %v238 = vsel %vm203, %v183, 0
        %v241 = vsel %vm203, %v184, 0
        %v244 = vsel %vm203, %v185, 0
        %v247 = vsel %vm203, %v186, 0
        %v250 = vsel %vm203, %v187, 0
        %v253 = vsel %vm203, %v188, 0
        %v256 = vsel %vm203, %v189, 0
        %v259 = vsel %vm203, %v190, 0
        %v262 = vsel %vm203, %v191, 0
        %v265 = vsel %vm203, %v192, 0
        %v268 = vsel %vm203, %v193, 0
        %v271 = vsel %vm203, %v194, 0
        %v274 = vsel %vm203, %v195, 0
        %276 = vmatprep.subr.mxu0 0.0
        %277 = vmatpush1.xpose.msra.mxu0 %v229
        %278 = vmatprep.subr.mxu0 0.0
        %279 = vmatpush1.xpose.msra.mxu0 %v232
        %280 = vmatprep.subr.mxu0 0.0
        %281 = vmatpush1.xpose.msra.mxu0 %v235
        %282 = vmatprep.subr.mxu0 0.0
        %283 = vmatpush1.xpose.msra.mxu0 %v238
        %284 = vmatprep.subr.mxu0 0.0
        %285 = vmatpush1.xpose.msra.mxu0 %v241
        %286 = vmatprep.subr.mxu0 0.0
        %287 = vmatpush1.xpose.msra.mxu0 %v244
        %288 = vmatprep.subr.mxu0 0.0
        %289 = vmatpush1.xpose.msra.mxu0 %v247
        %290 = vmatprep.subr.mxu0 0.0
        %291 = vmatpush1.xpose.msra.mxu0 %v250
        %292 = vmatprep.subr.mxu0 0.0
        %293 = vmatpush1.xpose.msra.mxu0 %v253
        %294 = vmatprep.subr.mxu0 0.0
        %295 = vmatpush1.xpose.msra.mxu0 %v256
        %296 = vmatprep.subr.mxu0 0.0
        %297 = vmatpush1.xpose.msra.mxu0 %v259
        %298 = vmatprep.subr.mxu0 0.0
        %299 = vmatpush1.xpose.msra.mxu0 %v262
        %300 = vmatprep.subr.mxu0 0.0
        %301 = vmatpush1.xpose.msra.mxu0 %v265
        %302 = vmatprep.subr.mxu0 0.0
        %303 = vmatpush1.xpose.msra.mxu0 %v268
        %304 = vmatprep.subr.mxu0 0.0
        %305 = vmatpush1.xpose.msra.mxu0 %v271
        %306 = vmatprep.subr.mxu0 0.0
        %307 = vmatpush1.xpose.msra.mxu0 %v274
        %308 = vmatprep.subr.mxu0 0.0
        %309 = vmatpush1.xpose.msra.mxu0 0.0
        %310 = vmatprep.subr.mxu0 0.0
        %311 = vmatpush1.xpose.msra.mxu0 0.0
        %312 = vmatprep.subr.mxu0 0.0
        %313 = vmatpush1.xpose.msra.mxu0 0.0
        %314 = vmatprep.subr.mxu0 0.0
        %315 = vmatpush1.xpose.msra.mxu0 0.0
        %316 = vmatprep.subr.mxu0 0.0
        %317 = vmatpush1.xpose.msra.mxu0 0.0
        %318 = vmatprep.subr.mxu0 0.0
        %319 = vmatpush1.xpose.msra.mxu0 0.0
        %320 = vmatprep.subr.mxu0 0.0
        %321 = vmatpush1.xpose.msra.mxu0 0.0
        %322 = vmatprep.subr.mxu0 0.0
        %323 = vmatpush1.xpose.msra.mxu0 0.0
        %324 = vmatprep.subr.mxu0 0.0
        %325 = vmatpush1.xpose.msra.mxu0 0.0
        %326 = vmatprep.subr.mxu0 0.0
        %327 = vmatpush1.xpose.msra.mxu0 0.0
        %328 = vmatprep.subr.mxu0 0.0
        %329 = vmatpush1.xpose.msra.mxu0 0.0
        %330 = vmatprep.subr.mxu0 0.0
        %331 = vmatpush1.xpose.msra.mxu0 0.0
        %332 = vmatprep.subr.mxu0 0.0
        %333 = vmatpush1.xpose.msra.mxu0 0.0
        %334 = vmatprep.subr.mxu0 0.0
        %335 = vmatpush1.xpose.msra.mxu0 0.0
        %336 = vmatprep.subr.mxu0 0.0
        %337 = vmatpush1.xpose.msra.mxu0 0.0
        %338 = vmatprep.subr.mxu0 0.0
        %339 = vmatpush1.xpose.msra.mxu0 0.0
        %340 = vmatprep.mubr.f32.mxu0 0.0
        %341 = vmatmul.mubr.f32.gmra.mrb[0].mxu0 %v205
        %v342 = vpop.f32.mrb[0].mxu0
        %v343 = vadd.f32 %v201, %v342
        %v344 = vpop.f32.mrb[0].mxu0
        %345 = vmatprep.mubr.f32.mxu0 0.0
        %346 = vmatmul.mubr.f32.gmra.mrb[0].mxu0 %v208
        %v347 = vpop.f32.mrb[0].mxu0
        %v348 = vadd.f32 %v201, %v347
        %v349 = vpop.f32.mrb[0].mxu0
        %350 = vmatprep.mubr.f32.mxu0 0.0
        %351 = vmatmul.mubr.f32.gmra.mrb[0].mxu0 %v211
        %v352 = vpop.f32.mrb[0].mxu0
        %v353 = vadd.f32 %v201, %v352
        %v354 = vpop.f32.mrb[0].mxu0
        %355 = vmatprep.mubr.f32.mxu0 0.0
        %356 = vmatmul.mubr.f32.gmra.mrb[0].mxu0 %v214
        %v357 = vpop.f32.mrb[0].mxu0
        %v358 = vadd.f32 %v201, %v357
        %v359 = vpop.f32.mrb[0].mxu0
        %360 = vmatprep.mubr.f32.mxu0 0.0
        %361 = vmatmul.mubr.f32.gmra.mrb[0].mxu0 %v217
        %v362 = vpop.f32.mrb[0].mxu0
        %v363 = vadd.f32 %v201, %v362
        %v364 = vpop.f32.mrb[0].mxu0
        %365 = vmatprep.mubr.f32.mxu0 0.0
        %366 = vmatmul.mubr.f32.gmra.mrb[0].mxu0 %v220
        %v367 = vpop.f32.mrb[0].mxu0
        %v368 = vadd.f32 %v201, %v367
        %v369 = vpop.f32.mrb[0].mxu0
        %370 = vmatprep.mubr.f32.mxu0 0.0
        %371 = vmatmul.mubr.f32.gmra.mrb[0].mxu0 %v223
        %v372 = vpop.f32.mrb[0].mxu0
        %v373 = vadd.f32 %v201, %v372
        %v374 = vpop.f32.mrb[0].mxu0
        %375 = vmatprep.mubr.f32.mxu0 0.0
        %376 = vmatmul.mubr.f32.gmra.mrb[0].mxu0 %v226
        %v377 = vpop.f32.mrb[0].mxu0
        %v378 = vadd.f32 %v201, %v377
        %v379 = vpop.f32.mrb[0].mxu0
        %380 = vdwg.mxu0
        %v381 = vmul.f32 %v343, 30.0
        %v382 = vmul.f32 %v348, 30.0
        %v383 = vmul.f32 %v353, 30.0
        %v384 = vmul.f32 %v358, 30.0
        %v385 = vmul.f32 %v363, 30.0
        %v386 = vmul.f32 %v368, 30.0
        %v387 = vmul.f32 %v373, 30.0
        %v388 = vmul.f32 %v378, 30.0
        %v389 = vand.u32 2147483647, %v381
        %vm390 = vcmp.le.f32.partialorder %v389, 0.7853982
        %vm391 = vcmp.lt.s32.totalorder %v381, 0
        %v392 = vand.u32 %v381, 2139095040
        %v393 = vshrl.u32 %v392, 23
        %v394 = vsub.s32 %v393, 127
        %v395 = vand.u32 2147483647, %v381
        %v396 = vand.u32 %v395, 8388607
        %v397 = vor.u32 %v396, 8388608
        %v398 = vsub.s32 0, %v397
        %v399 = vadd.s32 %v394, 1
        %vm400 = vcmp.gt.s32.totalorder %v399, 0
        %v401 = vsel %vm400, %v399, 0
        %v402 = vshrl.u32 %v401, 5
        %v403 = vand.u32 %v401, 31
        %v404 = vsub.s32 32, %v403
        %v405 = vshrl.u32 683565275, %v404
        %v406 = vshll.u32 683565275, %v403
        %v407 = vshrl.u32 2475754826, %v404
        %v408 = vor.u32 %v406, %v407
        %v409 = vshll.u32 2475754826, %v403
        %v410 = vshrl.u32 2131351028, %v404
        %v411 = vor.u32 %v409, %v410
        %v412 = vshll.u32 2131351028, %v403
        %v413 = vshrl.u32 2102212464, %v404
        %v414 = vor.u32 %v412, %v413
        %v415 = vshll.u32 2102212464, %v403
        %v416 = vshrl.u32 920167782, %v404
        %v417 = vor.u32 %v415, %v416
        %v418 = vshll.u32 920167782, %v403
        %v419 = vshrl.u32 1326507024, %v404
        %v420 = vor.u32 %v418, %v419
        %vm421 = vcmp.lt.s32.totalorder %v402, 1
        %vm422 = vcmp.lt.s32.totalorder %v402, 2
        %vm423 = vcmp.lt.s32.totalorder %v402, 3
        %vm424 = vcmp.lt.s32.totalorder %v402, 4
        %v425 = vsel %vm421, %v405, %v408
        %v426 = vsel %vm424, %v414, 2102212464
        %v427 = vsel %vm423, %v411, %v426
        %v428 = vsel %vm422, %v425, %v427
        %v429 = vsel %vm421, %v408, %v411
        %v430 = vsel %vm424, %v417, 920167782
        %v431 = vsel %vm423, %v414, %v430
        %v432 = vsel %vm422, %v429, %v431
        %v433 = vsel %vm421, %v411, %v414
        %v434 = vsel %vm424, %v420, 1326507024
        %v435 = vsel %vm423, %v417, %v434
        %v436 = vsel %vm422, %v433, %v435
        %v437 = vshll.u32 %v397, 8
        %v438 = vmul.u32.u64.compose %v437, %v436
        %v439 = vextract.low.u32 %v438
        %v440 = vextract.high.u32 %v438
        %v441 = vmul.u32.u64.compose %v437, %v432
        %v442 = vextract.low.u32 %v441
        %v443 = vextract.high.u32 %v441
        %v444 = vmul.u32 %v437, %v428
        %v445 = vadd.s32 %v440, %v442
        %vm446 = vc.u32 %v440, %v442
        %v447 = vadd.s32 %v443, 1
        %v448 = vsel %vm446, %v447, %v443
        %v449 = vadd.s32 %v444, %v448
        %v450 = vadd.s32 %v449, 536870912
        %v451 = vshrl.u32 %v450, 30
        %v452 = vshll.u32 %v451, 30
        %v453 = vsub.s32 %v449, %v452
        %vm454 = vcmp.lt.s32.totalorder %v453, 0
        %v455 = vsub.s32 0, %v453
        %v456 = vsel %vm454, %v455, %v453
        %v457 = vclz %v456
        %v458 = vsub.s32 %v457, 2
        %vm459 = vcmp.gt.s32.totalorder 0, %v458
        %v460 = vsel %vm459, 0, %v458
        %v461 = vsub.s32 32, %v460
        %v462 = vshll.u32 %v453, %v460
        %v463 = vshrl.u32 %v445, %v461
        %v464 = vor.u32 %v462, %v463
        %v465 = vsub.s32 4294967266, %v460
        %v466 = vadd.s32 %v465, 127
        %v467 = vshll.u32 %v466, 23
        %v468 = vor.u32 4788187, %v467
        %v469 = vand.u32 2147483647, %v468
        %v471 = vcvt.s32.f32 %v464
        %v472 = vmul.f32 %v471, %v469
        %v473 = vxor.u32 %v472, 2147483648
        %v474 = vsel %vm391, %v473, %v472
        %v475 = vsub.s32 4, %v451
        %v476 = vsel %vm391, %v475, %v451
        %v477 = vsel %vm390, %v381, %v474
        %v478 = vsel %vm390, 0, %v476
        %v479 = vcosq.f32.pop %v477
        %v480 = vsinq.f32.pop %v477
        %vm481 = vweird.f32 %v381
        %v482 = vadd.s32 %v478, 3
        %v483 = vand.u32 %v482, 3
        %vm484 = vcmp.lt.s32.totalorder %v483, 2
        %vm485 = vcmp.eq.s32.totalorder %v483, 0
        %v486 = vxor.u32 %v480, 2147483648
        %v487 = vsel %vm485, %v479, %v486
        %vm488 = vcmp.eq.s32.totalorder %v483, 2
        %v489 = vxor.u32 %v479, 2147483648
        %v490 = vsel %vm488, %v489, %v480
        %v491 = vsel %vm484, %v487, %v490
        %v492 = vsel %vm481, nan, %v491
        %v493 = vand.u32 2147483647, %v382
        %vm494 = vcmp.le.f32.partialorder %v493, 0.7853982
        %vm495 = vcmp.lt.s32.totalorder %v382, 0
        %v496 = vand.u32 %v382, 2139095040
        %v497 = vshrl.u32 %v496, 23
        %v498 = vsub.s32 %v497, 127
        %v499 = vand.u32 2147483647, %v382
        %v500 = vand.u32 %v499, 8388607
        %v501 = vor.u32 %v500, 8388608
        %v502 = vsub.s32 0, %v501
        %v503 = vadd.s32 %v498, 1
        %vm504 = vcmp.gt.s32.totalorder %v503, 0
        %v505 = vsel %vm504, %v503, 0
        %v506 = vshrl.u32 %v505, 5
        %v507 = vand.u32 %v505, 31
        %v508 = vsub.s32 32, %v507
        %v509 = vshrl.u32 683565275, %v508
        %v510 = vshll.u32 683565275, %v507
        %v511 = vshrl.u32 2475754826, %v508
        %v512 = vor.u32 %v510, %v511
        %v513 = vshll.u32 2475754826, %v507
        %v514 = vshrl.u32 2131351028, %v508
        %v515 = vor.u32 %v513, %v514
        %v516 = vshll.u32 2131351028, %v507
        %v517 = vshrl.u32 2102212464, %v508
        %v518 = vor.u32 %v516, %v517
        %v519 = vshll.u32 2102212464, %v507
        %v520 = vshrl.u32 920167782, %v508
        %v521 = vor.u32 %v519, %v520
        %v522 = vshll.u32 920167782, %v507
        %v523 = vshrl.u32 1326507024, %v508
        %v524 = vor.u32 %v522, %v523
        %vm525 = vcmp.lt.s32.totalorder %v506, 1
        %vm526 = vcmp.lt.s32.totalorder %v506, 2
        %vm527 = vcmp.lt.s32.totalorder %v506, 3
        %vm528 = vcmp.lt.s32.totalorder %v506, 4
        %v529 = vsel %vm525, %v509, %v512
        %v530 = vsel %vm528, %v518, 2102212464
        %v531 = vsel %vm527, %v515, %v530
        %v532 = vsel %vm526, %v529, %v531
        %v533 = vsel %vm525, %v512, %v515
        %v534 = vsel %vm528, %v521, 920167782
        %v535 = vsel %vm527, %v518, %v534
        %v536 = vsel %vm526, %v533, %v535
        %v537 = vsel %vm525, %v515, %v518
        %v538 = vsel %vm528, %v524, 1326507024
        %v539 = vsel %vm527, %v521, %v538
        %v540 = vsel %vm526, %v537, %v539
        %v541 = vshll.u32 %v501, 8
        %v542 = vmul.u32.u64.compose %v541, %v540
        %v543 = vextract.low.u32 %v542
        %v544 = vextract.high.u32 %v542
        %v545 = vmul.u32.u64.compose %v541, %v536
        %v546 = vextract.low.u32 %v545
        %v547 = vextract.high.u32 %v545
        %v548 = vmul.u32 %v541, %v532
        %v549 = vadd.s32 %v544, %v546
        %vm550 = vc.u32 %v544, %v546
        %v551 = vadd.s32 %v547, 1
        %v552 = vsel %vm550, %v551, %v547
        %v553 = vadd.s32 %v548, %v552
        %v554 = vadd.s32 %v553, 536870912
        %v555 = vshrl.u32 %v554, 30
        %v556 = vshll.u32 %v555, 30
        %v557 = vsub.s32 %v553, %v556
        %vm558 = vcmp.lt.s32.totalorder %v557, 0
        %v559 = vsub.s32 0, %v557
        %v560 = vsel %vm558, %v559, %v557
        %v561 = vclz %v560
        %v562 = vsub.s32 %v561, 2
        %vm563 = vcmp.gt.s32.totalorder 0, %v562
        %v564 = vsel %vm563, 0, %v562
        %v565 = vsub.s32 32, %v564
        %v566 = vshll.u32 %v557, %v564
        %v567 = vshrl.u32 %v549, %v565
        %v568 = vor.u32 %v566, %v567
        %v569 = vsub.s32 4294967266, %v564
        %v570 = vadd.s32 %v569, 127
        %v571 = vshll.u32 %v570, 23
        %v572 = vor.u32 4788187, %v571
        %v573 = vand.u32 2147483647, %v572
        %v575 = vcvt.s32.f32 %v568
        %v576 = vmul.f32 %v575, %v573
        %v577 = vxor.u32 %v576, 2147483648
        %v578 = vsel %vm495, %v577, %v576
        %v579 = vsub.s32 4, %v555
        %v580 = vsel %vm495, %v579, %v555
        %v581 = vsel %vm494, %v382, %v578
        %v582 = vsel %vm494, 0, %v580
        %v583 = vcosq.f32.pop %v581
        %v584 = vsinq.f32.pop %v581
        %vm585 = vweird.f32 %v382
        %v586 = vadd.s32 %v582, 3
        %v587 = vand.u32 %v586, 3
        %vm588 = vcmp.lt.s32.totalorder %v587, 2
        %vm589 = vcmp.eq.s32.totalorder %v587, 0
        %v590 = vxor.u32 %v584, 2147483648
        %v591 = vsel %vm589, %v583, %v590
        %vm592 = vcmp.eq.s32.totalorder %v587, 2
        %v593 = vxor.u32 %v583, 2147483648
        %v594 = vsel %vm592, %v593, %v584
        %v595 = vsel %vm588, %v591, %v594
        %v596 = vsel %vm585, nan, %v595
        %v597 = vand.u32 2147483647, %v383
        %vm598 = vcmp.le.f32.partialorder %v597, 0.7853982
        %vm599 = vcmp.lt.s32.totalorder %v383, 0
        %v600 = vand.u32 %v383, 2139095040
        %v601 = vshrl.u32 %v600, 23
        %v602 = vsub.s32 %v601, 127
        %v603 = vand.u32 2147483647, %v383
        %v604 = vand.u32 %v603, 8388607
        %v605 = vor.u32 %v604, 8388608
        %v606 = vsub.s32 0, %v605
        %v607 = vadd.s32 %v602, 1
        %vm608 = vcmp.gt.s32.totalorder %v607, 0
        %v609 = vsel %vm608, %v607, 0
        %v610 = vshrl.u32 %v609, 5
        %v611 = vand.u32 %v609, 31
        %v612 = vsub.s32 32, %v611
        %v613 = vshrl.u32 683565275, %v612
        %v614 = vshll.u32 683565275, %v611
        %v615 = vshrl.u32 2475754826, %v612
        %v616 = vor.u32 %v614, %v615
        %v617 = vshll.u32 2475754826, %v611
        %v618 = vshrl.u32 2131351028, %v612
        %v619 = vor.u32 %v617, %v618
        %v620 = vshll.u32 2131351028, %v611
        %v621 = vshrl.u32 2102212464, %v612
        %v622 = vor.u32 %v620, %v621
        %v623 = vshll.u32 2102212464, %v611
        %v624 = vshrl.u32 920167782, %v612
        %v625 = vor.u32 %v623, %v624
        %v626 = vshll.u32 920167782, %v611
        %v627 = vshrl.u32 1326507024, %v612
        %v628 = vor.u32 %v626, %v627
        %vm629 = vcmp.lt.s32.totalorder %v610, 1
        %vm630 = vcmp.lt.s32.totalorder %v610, 2
        %vm631 = vcmp.lt.s32.totalorder %v610, 3
        %vm632 = vcmp.lt.s32.totalorder %v610, 4
        %v633 = vsel %vm629, %v613, %v616
        %v634 = vsel %vm632, %v622, 2102212464
        %v635 = vsel %vm631, %v619, %v634
        %v636 = vsel %vm630, %v633, %v635
        %v637 = vsel %vm629, %v616, %v619
        %v638 = vsel %vm632, %v625, 920167782
        %v639 = vsel %vm631, %v622, %v638
        %v640 = vsel %vm630, %v637, %v639
        %v641 = vsel %vm629, %v619, %v622
        %v642 = vsel %vm632, %v628, 1326507024
        %v643 = vsel %vm631, %v625, %v642
        %v644 = vsel %vm630, %v641, %v643
        %v645 = vshll.u32 %v605, 8
        %v646 = vmul.u32.u64.compose %v645, %v644
        %v647 = vextract.low.u32 %v646
        %v648 = vextract.high.u32 %v646
        %v649 = vmul.u32.u64.compose %v645, %v640
        %v650 = vextract.low.u32 %v649
        %v651 = vextract.high.u32 %v649
        %v652 = vmul.u32 %v645, %v636
        %v653 = vadd.s32 %v648, %v650
        %vm654 = vc.u32 %v648, %v650
        %v655 = vadd.s32 %v651, 1
        %v656 = vsel %vm654, %v655, %v651
        %v657 = vadd.s32 %v652, %v656
        %v658 = vadd.s32 %v657, 536870912
        %v659 = vshrl.u32 %v658, 30
        %v660 = vshll.u32 %v659, 30
        %v661 = vsub.s32 %v657, %v660
        %vm662 = vcmp.lt.s32.totalorder %v661, 0
        %v663 = vsub.s32 0, %v661
        %v664 = vsel %vm662, %v663, %v661
        %v665 = vclz %v664
        %v666 = vsub.s32 %v665, 2
        %vm667 = vcmp.gt.s32.totalorder 0, %v666
        %v668 = vsel %vm667, 0, %v666
        %v669 = vsub.s32 32, %v668
        %v670 = vshll.u32 %v661, %v668
        %v671 = vshrl.u32 %v653, %v669
        %v672 = vor.u32 %v670, %v671
        %v673 = vsub.s32 4294967266, %v668
        %v674 = vadd.s32 %v673, 127
        %v675 = vshll.u32 %v674, 23
        %v676 = vor.u32 4788187, %v675
        %v677 = vand.u32 2147483647, %v676
        %v679 = vcvt.s32.f32 %v672
        %v680 = vmul.f32 %v679, %v677
        %v681 = vxor.u32 %v680, 2147483648
        %v682 = vsel %vm599, %v681, %v680
        %v683 = vsub.s32 4, %v659
        %v684 = vsel %vm599, %v683, %v659
        %v685 = vsel %vm598, %v383, %v682
        %v686 = vsel %vm598, 0, %v684
        %v687 = vcosq.f32.pop %v685
        %v688 = vsinq.f32.pop %v685
        %vm689 = vweird.f32 %v383
        %v690 = vadd.s32 %v686, 3
        %v691 = vand.u32 %v690, 3
        %vm692 = vcmp.lt.s32.totalorder %v691, 2
        %vm693 = vcmp.eq.s32.totalorder %v691, 0
        %v694 = vxor.u32 %v688, 2147483648
        %v695 = vsel %vm693, %v687, %v694
        %vm696 = vcmp.eq.s32.totalorder %v691, 2
        %v697 = vxor.u32 %v687, 2147483648
        %v698 = vsel %vm696, %v697, %v688
        %v699 = vsel %vm692, %v695, %v698
        %v700 = vsel %vm689, nan, %v699
        %v701 = vand.u32 2147483647, %v384
        %vm702 = vcmp.le.f32.partialorder %v701, 0.7853982
        %vm703 = vcmp.lt.s32.totalorder %v384, 0
        %v704 = vand.u32 %v384, 2139095040
        %v705 = vshrl.u32 %v704, 23
        %v706 = vsub.s32 %v705, 127
        %v707 = vand.u32 2147483647, %v384
        %v708 = vand.u32 %v707, 8388607
        %v709 = vor.u32 %v708, 8388608
        %v710 = vsub.s32 0, %v709
        %v711 = vadd.s32 %v706, 1
        %vm712 = vcmp.gt.s32.totalorder %v711, 0
        %v713 = vsel %vm712, %v711, 0
        %v714 = vshrl.u32 %v713, 5
        %v715 = vand.u32 %v713, 31
        %v716 = vsub.s32 32, %v715
        %v717 = vshrl.u32 683565275, %v716
        %v718 = vshll.u32 683565275, %v715
        %v719 = vshrl.u32 2475754826, %v716
        %v720 = vor.u32 %v718, %v719
        %v721 = vshll.u32 2475754826, %v715
        %v722 = vshrl.u32 2131351028, %v716
        %v723 = vor.u32 %v721, %v722
        %v724 = vshll.u32 2131351028, %v715
        %v725 = vshrl.u32 2102212464, %v716
        %v726 = vor.u32 %v724, %v725
        %v727 = vshll.u32 2102212464, %v715
        %v728 = vshrl.u32 920167782, %v716
        %v729 = vor.u32 %v727, %v728
        %v730 = vshll.u32 920167782, %v715
        %v731 = vshrl.u32 1326507024, %v716
        %v732 = vor.u32 %v730, %v731
        %vm733 = vcmp.lt.s32.totalorder %v714, 1
        %vm734 = vcmp.lt.s32.totalorder %v714, 2
        %vm735 = vcmp.lt.s32.totalorder %v714, 3
        %vm736 = vcmp.lt.s32.totalorder %v714, 4
        %v737 = vsel %vm733, %v717, %v720
        %v738 = vsel %vm736, %v726, 2102212464
        %v739 = vsel %vm735, %v723, %v738
        %v740 = vsel %vm734, %v737, %v739
        %v741 = vsel %vm733, %v720, %v723
        %v742 = vsel %vm736, %v729, 920167782
        %v743 = vsel %vm735, %v726, %v742
        %v744 = vsel %vm734, %v741, %v743
        %v745 = vsel %vm733, %v723, %v726
        %v746 = vsel %vm736, %v732, 1326507024
        %v747 = vsel %vm735, %v729, %v746
        %v748 = vsel %vm734, %v745, %v747
        %v749 = vshll.u32 %v709, 8
        %v750 = vmul.u32.u64.compose %v749, %v748
        %v751 = vextract.low.u32 %v750
        %v752 = vextract.high.u32 %v750
        %v753 = vmul.u32.u64.compose %v749, %v744
        %v754 = vextract.low.u32 %v753
        %v755 = vextract.high.u32 %v753
        %v756 = vmul.u32 %v749, %v740
        %v757 = vadd.s32 %v752, %v754
        %vm758 = vc.u32 %v752, %v754
        %v759 = vadd.s32 %v755, 1
        %v760 = vsel %vm758, %v759, %v755
        %v761 = vadd.s32 %v756, %v760
        %v762 = vadd.s32 %v761, 536870912
        %v763 = vshrl.u32 %v762, 30
        %v764 = vshll.u32 %v763, 30
        %v765 = vsub.s32 %v761, %v764
        %vm766 = vcmp.lt.s32.totalorder %v765, 0
        %v767 = vsub.s32 0, %v765
        %v768 = vsel %vm766, %v767, %v765
        %v769 = vclz %v768
        %v770 = vsub.s32 %v769, 2
        %vm771 = vcmp.gt.s32.totalorder 0, %v770
        %v772 = vsel %vm771, 0, %v770
        %v773 = vsub.s32 32, %v772
        %v774 = vshll.u32 %v765, %v772
        %v775 = vshrl.u32 %v757, %v773
        %v776 = vor.u32 %v774, %v775
        %v777 = vsub.s32 4294967266, %v772
        %v778 = vadd.s32 %v777, 127
        %v779 = vshll.u32 %v778, 23
        %v780 = vor.u32 4788187, %v779
        %v781 = vand.u32 2147483647, %v780
        %v783 = vcvt.s32.f32 %v776
        %v784 = vmul.f32 %v783, %v781
        %v785 = vxor.u32 %v784, 2147483648
        %v786 = vsel %vm703, %v785, %v784
        %v787 = vsub.s32 4, %v763
        %v788 = vsel %vm703, %v787, %v763
        %v789 = vsel %vm702, %v384, %v786
        %v790 = vsel %vm702, 0, %v788
        %v791 = vcosq.f32.pop %v789
        %v792 = vsinq.f32.pop %v789
        %vm793 = vweird.f32 %v384
        %v794 = vadd.s32 %v790, 3
        %v795 = vand.u32 %v794, 3
        %vm796 = vcmp.lt.s32.totalorder %v795, 2
        %vm797 = vcmp.eq.s32.totalorder %v795, 0
        %v798 = vxor.u32 %v792, 2147483648
        %v799 = vsel %vm797, %v791, %v798
        %vm800 = vcmp.eq.s32.totalorder %v795, 2
        %v801 = vxor.u32 %v791, 2147483648
        %v802 = vsel %vm800, %v801, %v792
        %v803 = vsel %vm796, %v799, %v802
        %v804 = vsel %vm793, nan, %v803
        %v805 = vand.u32 2147483647, %v385
        %vm806 = vcmp.le.f32.partialorder %v805, 0.7853982
        %vm807 = vcmp.lt.s32.totalorder %v385, 0
        %v808 = vand.u32 %v385, 2139095040
        %v809 = vshrl.u32 %v808, 23
        %v810 = vsub.s32 %v809, 127
        %v811 = vand.u32 2147483647, %v385
        %v812 = vand.u32 %v811, 8388607
        %v813 = vor.u32 %v812, 8388608
        %v814 = vsub.s32 0, %v813
        %v815 = vadd.s32 %v810, 1
        %vm816 = vcmp.gt.s32.totalorder %v815, 0
        %v817 = vsel %vm816, %v815, 0
        %v818 = vshrl.u32 %v817, 5
        %v819 = vand.u32 %v817, 31
        %v820 = vsub.s32 32, %v819
        %v821 = vshrl.u32 683565275, %v820
        %v822 = vshll.u32 683565275, %v819
        %v823 = vshrl.u32 2475754826, %v820
        %v824 = vor.u32 %v822, %v823
        %v825 = vshll.u32 2475754826, %v819
        %v826 = vshrl.u32 2131351028, %v820
        %v827 = vor.u32 %v825, %v826
        %v828 = vshll.u32 2131351028, %v819
        %v829 = vshrl.u32 2102212464, %v820
        %v830 = vor.u32 %v828, %v829
        %v831 = vshll.u32 2102212464, %v819
        %v832 = vshrl.u32 920167782, %v820
        %v833 = vor.u32 %v831, %v832
        %v834 = vshll.u32 920167782, %v819
        %v835 = vshrl.u32 1326507024, %v820
        %v836 = vor.u32 %v834, %v835
        %vm837 = vcmp.lt.s32.totalorder %v818, 1
        %vm838 = vcmp.lt.s32.totalorder %v818, 2
        %vm839 = vcmp.lt.s32.totalorder %v818, 3
        %vm840 = vcmp.lt.s32.totalorder %v818, 4
        %v841 = vsel %vm837, %v821, %v824
        %v842 = vsel %vm840, %v830, 2102212464
        %v843 = vsel %vm839, %v827, %v842
        %v844 = vsel %vm838, %v841, %v843
        %v845 = vsel %vm837, %v824, %v827
        %v846 = vsel %vm840, %v833, 920167782
        %v847 = vsel %vm839, %v830, %v846
        %v848 = vsel %vm838, %v845, %v847
        %v849 = vsel %vm837, %v827, %v830
        %v850 = vsel %vm840, %v836, 1326507024
        %v851 = vsel %vm839, %v833, %v850
        %v852 = vsel %vm838, %v849, %v851
        %v853 = vshll.u32 %v813, 8
        %v854 = vmul.u32.u64.compose %v853, %v852
        %v855 = vextract.low.u32 %v854
        %v856 = vextract.high.u32 %v854
        %v857 = vmul.u32.u64.compose %v853, %v848
        %v858 = vextract.low.u32 %v857
        %v859 = vextract.high.u32 %v857
        %v860 = vmul.u32 %v853, %v844
        %v861 = vadd.s32 %v856, %v858
        %vm862 = vc.u32 %v856, %v858
        %v863 = vadd.s32 %v859, 1
        %v864 = vsel %vm862, %v863, %v859
        %v865 = vadd.s32 %v860, %v864
        %v866 = vadd.s32 %v865, 536870912
        %v867 = vshrl.u32 %v866, 30
        %v868 = vshll.u32 %v867, 30
        %v869 = vsub.s32 %v865, %v868
        %vm870 = vcmp.lt.s32.totalorder %v869, 0
        %v871 = vsub.s32 0, %v869
        %v872 = vsel %vm870, %v871, %v869
        %v873 = vclz %v872
        %v874 = vsub.s32 %v873, 2
        %vm875 = vcmp.gt.s32.totalorder 0, %v874
        %v876 = vsel %vm875, 0, %v874
        %v877 = vsub.s32 32, %v876
        %v878 = vshll.u32 %v869, %v876
        %v879 = vshrl.u32 %v861, %v877
        %v880 = vor.u32 %v878, %v879
        %v881 = vsub.s32 4294967266, %v876
        %v882 = vadd.s32 %v881, 127
        %v883 = vshll.u32 %v882, 23
        %v884 = vor.u32 4788187, %v883
        %v885 = vand.u32 2147483647, %v884
        %v887 = vcvt.s32.f32 %v880
        %v888 = vmul.f32 %v887, %v885
        %v889 = vxor.u32 %v888, 2147483648
        %v890 = vsel %vm807, %v889, %v888
        %v891 = vsub.s32 4, %v867
        %v892 = vsel %vm807, %v891, %v867
        %v893 = vsel %vm806, %v385, %v890
        %v894 = vsel %vm806, 0, %v892
        %v895 = vcosq.f32.pop %v893
        %v896 = vsinq.f32.pop %v893
        %vm897 = vweird.f32 %v385
        %v898 = vadd.s32 %v894, 3
        %v899 = vand.u32 %v898, 3
        %vm900 = vcmp.lt.s32.totalorder %v899, 2
        %vm901 = vcmp.eq.s32.totalorder %v899, 0
        %v902 = vxor.u32 %v896, 2147483648
        %v903 = vsel %vm901, %v895, %v902
        %vm904 = vcmp.eq.s32.totalorder %v899, 2
        %v905 = vxor.u32 %v895, 2147483648
        %v906 = vsel %vm904, %v905, %v896
        %v907 = vsel %vm900, %v903, %v906
        %v908 = vsel %vm897, nan, %v907
        %v909 = vand.u32 2147483647, %v386
        %vm910 = vcmp.le.f32.partialorder %v909, 0.7853982
        %vm911 = vcmp.lt.s32.totalorder %v386, 0
        %v912 = vand.u32 %v386, 2139095040
        %v913 = vshrl.u32 %v912, 23
        %v914 = vsub.s32 %v913, 127
        %v915 = vand.u32 2147483647, %v386
        %v916 = vand.u32 %v915, 8388607
        %v917 = vor.u32 %v916, 8388608
        %v918 = vsub.s32 0, %v917
        %v919 = vadd.s32 %v914, 1
        %vm920 = vcmp.gt.s32.totalorder %v919, 0
        %v921 = vsel %vm920, %v919, 0
        %v922 = vshrl.u32 %v921, 5
        %v923 = vand.u32 %v921, 31
        %v924 = vsub.s32 32, %v923
        %v925 = vshrl.u32 683565275, %v924
        %v926 = vshll.u32 683565275, %v923
        %v927 = vshrl.u32 2475754826, %v924
        %v928 = vor.u32 %v926, %v927
        %v929 = vshll.u32 2475754826, %v923
        %v930 = vshrl.u32 2131351028, %v924
        %v931 = vor.u32 %v929, %v930
        %v932 = vshll.u32 2131351028, %v923
        %v933 = vshrl.u32 2102212464, %v924
        %v934 = vor.u32 %v932, %v933
        %v935 = vshll.u32 2102212464, %v923
        %v936 = vshrl.u32 920167782, %v924
        %v937 = vor.u32 %v935, %v936
        %v938 = vshll.u32 920167782, %v923
        %v939 = vshrl.u32 1326507024, %v924
        %v940 = vor.u32 %v938, %v939
        %vm941 = vcmp.lt.s32.totalorder %v922, 1
        %vm942 = vcmp.lt.s32.totalorder %v922, 2
        %vm943 = vcmp.lt.s32.totalorder %v922, 3
        %vm944 = vcmp.lt.s32.totalorder %v922, 4
        %v945 = vsel %vm941, %v925, %v928
        %v946 = vsel %vm944, %v934, 2102212464
        %v947 = vsel %vm943, %v931, %v946
        %v948 = vsel %vm942, %v945, %v947
        %v949 = vsel %vm941, %v928, %v931
        %v950 = vsel %vm944, %v937, 920167782
        %v951 = vsel %vm943, %v934, %v950
        %v952 = vsel %vm942, %v949, %v951
        %v953 = vsel %vm941, %v931, %v934
        %v954 = vsel %vm944, %v940, 1326507024
        %v955 = vsel %vm943, %v937, %v954
        %v956 = vsel %vm942, %v953, %v955
        %v957 = vshll.u32 %v917, 8
        %v958 = vmul.u32.u64.compose %v957, %v956
        %v959 = vextract.low.u32 %v958
        %v960 = vextract.high.u32 %v958
        %v961 = vmul.u32.u64.compose %v957, %v952
        %v962 = vextract.low.u32 %v961
        %v963 = vextract.high.u32 %v961
        %v964 = vmul.u32 %v957, %v948
        %v965 = vadd.s32 %v960, %v962
        %vm966 = vc.u32 %v960, %v962
        %v967 = vadd.s32 %v963, 1
        %v968 = vsel %vm966, %v967, %v963
        %v969 = vadd.s32 %v964, %v968
        %v970 = vadd.s32 %v969, 536870912
        %v971 = vshrl.u32 %v970, 30
        %v972 = vshll.u32 %v971, 30
        %v973 = vsub.s32 %v969, %v972
        %vm974 = vcmp.lt.s32.totalorder %v973, 0
        %v975 = vsub.s32 0, %v973
        %v976 = vsel %vm974, %v975, %v973
        %v977 = vclz %v976
        %v978 = vsub.s32 %v977, 2
        %vm979 = vcmp.gt.s32.totalorder 0, %v978
        %v980 = vsel %vm979, 0, %v978
        %v981 = vsub.s32 32, %v980
        %v982 = vshll.u32 %v973, %v980
        %v983 = vshrl.u32 %v965, %v981
        %v984 = vor.u32 %v982, %v983
        %v985 = vsub.s32 4294967266, %v980
        %v986 = vadd.s32 %v985, 127
        %v987 = vshll.u32 %v986, 23
        %v988 = vor.u32 4788187, %v987
        %v989 = vand.u32 2147483647, %v988
        %v991 = vcvt.s32.f32 %v984
        %v992 = vmul.f32 %v991, %v989
        %v993 = vxor.u32 %v992, 2147483648
        %v994 = vsel %vm911, %v993, %v992
        %v995 = vsub.s32 4, %v971
        %v996 = vsel %vm911, %v995, %v971
        %v997 = vsel %vm910, %v386, %v994
        %v998 = vsel %vm910, 0, %v996
        %v999 = vcosq.f32.pop %v997
        %v1000 = vsinq.f32.pop %v997
        %vm1001 = vweird.f32 %v386
        %v1002 = vadd.s32 %v998, 3
        %v1003 = vand.u32 %v1002, 3
        %vm1004 = vcmp.lt.s32.totalorder %v1003, 2
        %vm1005 = vcmp.eq.s32.totalorder %v1003, 0
        %v1006 = vxor.u32 %v1000, 2147483648
        %v1007 = vsel %vm1005, %v999, %v1006
        %vm1008 = vcmp.eq.s32.totalorder %v1003, 2
        %v1009 = vxor.u32 %v999, 2147483648
        %v1010 = vsel %vm1008, %v1009, %v1000
        %v1011 = vsel %vm1004, %v1007, %v1010
        %v1012 = vsel %vm1001, nan, %v1011
        %v1013 = vand.u32 2147483647, %v387
        %vm1014 = vcmp.le.f32.partialorder %v1013, 0.7853982
        %vm1015 = vcmp.lt.s32.totalorder %v387, 0
        %v1016 = vand.u32 %v387, 2139095040
        %v1017 = vshrl.u32 %v1016, 23
        %v1018 = vsub.s32 %v1017, 127
        %v1019 = vand.u32 2147483647, %v387
        %v1020 = vand.u32 %v1019, 8388607
        %v1021 = vor.u32 %v1020, 8388608
        %v1022 = vsub.s32 0, %v1021
        %v1023 = vadd.s32 %v1018, 1
        %vm1024 = vcmp.gt.s32.totalorder %v1023, 0
        %v1025 = vsel %vm1024, %v1023, 0
        %v1026 = vshrl.u32 %v1025, 5
        %v1027 = vand.u32 %v1025, 31
        %v1028 = vsub.s32 32, %v1027
        %v1029 = vshrl.u32 683565275, %v1028
        %v1030 = vshll.u32 683565275, %v1027
        %v1031 = vshrl.u32 2475754826, %v1028
        %v1032 = vor.u32 %v1030, %v1031
        %v1033 = vshll.u32 2475754826, %v1027
        %v1034 = vshrl.u32 2131351028, %v1028
        %v1035 = vor.u32 %v1033, %v1034
        %v1036 = vshll.u32 2131351028, %v1027
        %v1037 = vshrl.u32 2102212464, %v1028
        %v1038 = vor.u32 %v1036, %v1037
        %v1039 = vshll.u32 2102212464, %v1027
        %v1040 = vshrl.u32 920167782, %v1028
        %v1041 = vor.u32 %v1039, %v1040
        %v1042 = vshll.u32 920167782, %v1027
        %v1043 = vshrl.u32 1326507024, %v1028
        %v1044 = vor.u32 %v1042, %v1043
        %vm1045 = vcmp.lt.s32.totalorder %v1026, 1
        %vm1046 = vcmp.lt.s32.totalorder %v1026, 2
        %vm1047 = vcmp.lt.s32.totalorder %v1026, 3
        %vm1048 = vcmp.lt.s32.totalorder %v1026, 4
        %v1049 = vsel %vm1045, %v1029, %v1032
        %v1050 = vsel %vm1048, %v1038, 2102212464
        %v1051 = vsel %vm1047, %v1035, %v1050
        %v1052 = vsel %vm1046, %v1049, %v1051
        %v1053 = vsel %vm1045, %v1032, %v1035
        %v1054 = vsel %vm1048, %v1041, 920167782
        %v1055 = vsel %vm1047, %v1038, %v1054
        %v1056 = vsel %vm1046, %v1053, %v1055
        %v1057 = vsel %vm1045, %v1035, %v1038
        %v1058 = vsel %vm1048, %v1044, 1326507024
        %v1059 = vsel %vm1047, %v1041, %v1058
        %v1060 = vsel %vm1046, %v1057, %v1059
        %v1061 = vshll.u32 %v1021, 8
        %v1062 = vmul.u32.u64.compose %v1061, %v1060
        %v1063 = vextract.low.u32 %v1062
        %v1064 = vextract.high.u32 %v1062
        %v1065 = vmul.u32.u64.compose %v1061, %v1056
        %v1066 = vextract.low.u32 %v1065
        %v1067 = vextract.high.u32 %v1065
        %v1068 = vmul.u32 %v1061, %v1052
        %v1069 = vadd.s32 %v1064, %v1066
        %vm1070 = vc.u32 %v1064, %v1066
        %v1071 = vadd.s32 %v1067, 1
        %v1072 = vsel %vm1070, %v1071, %v1067
        %v1073 = vadd.s32 %v1068, %v1072
        %v1074 = vadd.s32 %v1073, 536870912
        %v1075 = vshrl.u32 %v1074, 30
        %v1076 = vshll.u32 %v1075, 30
        %v1077 = vsub.s32 %v1073, %v1076
        %vm1078 = vcmp.lt.s32.totalorder %v1077, 0
        %v1079 = vsub.s32 0, %v1077
        %v1080 = vsel %vm1078, %v1079, %v1077
        %v1081 = vclz %v1080
        %v1082 = vsub.s32 %v1081, 2
        %vm1083 = vcmp.gt.s32.totalorder 0, %v1082
        %v1084 = vsel %vm1083, 0, %v1082
        %v1085 = vsub.s32 32, %v1084
        %v1086 = vshll.u32 %v1077, %v1084
        %v1087 = vshrl.u32 %v1069, %v1085
        %v1088 = vor.u32 %v1086, %v1087
        %v1089 = vsub.s32 4294967266, %v1084
        %v1090 = vadd.s32 %v1089, 127
        %v1091 = vshll.u32 %v1090, 23
        %v1092 = vor.u32 4788187, %v1091
        %v1093 = vand.u32 2147483647, %v1092
        %v1095 = vcvt.s32.f32 %v1088
        %v1096 = vmul.f32 %v1095, %v1093
        %v1097 = vxor.u32 %v1096, 2147483648
        %v1098 = vsel %vm1015, %v1097, %v1096
        %v1099 = vsub.s32 4, %v1075
        %v1100 = vsel %vm1015, %v1099, %v1075
        %v1101 = vsel %vm1014, %v387, %v1098
        %v1102 = vsel %vm1014, 0, %v1100
        %v1103 = vcosq.f32.pop %v1101
        %v1104 = vsinq.f32.pop %v1101
        %vm1105 = vweird.f32 %v387
        %v1106 = vadd.s32 %v1102, 3
        %v1107 = vand.u32 %v1106, 3
        %vm1108 = vcmp.lt.s32.totalorder %v1107, 2
        %vm1109 = vcmp.eq.s32.totalorder %v1107, 0
        %v1110 = vxor.u32 %v1104, 2147483648
        %v1111 = vsel %vm1109, %v1103, %v1110
        %vm1112 = vcmp.eq.s32.totalorder %v1107, 2
        %v1113 = vxor.u32 %v1103, 2147483648
        %v1114 = vsel %vm1112, %v1113, %v1104
        %v1115 = vsel %vm1108, %v1111, %v1114
        %v1116 = vsel %vm1105, nan, %v1115
        %v1117 = vand.u32 2147483647, %v388
        %vm1118 = vcmp.le.f32.partialorder %v1117, 0.7853982
        %vm1119 = vcmp.lt.s32.totalorder %v388, 0
        %v1120 = vand.u32 %v388, 2139095040
        %v1121 = vshrl.u32 %v1120, 23
        %v1122 = vsub.s32 %v1121, 127
        %v1123 = vand.u32 2147483647, %v388
        %v1124 = vand.u32 %v1123, 8388607
        %v1125 = vor.u32 %v1124, 8388608
        %v1126 = vsub.s32 0, %v1125
        %v1127 = vadd.s32 %v1122, 1
        %vm1128 = vcmp.gt.s32.totalorder %v1127, 0
        %v1129 = vsel %vm1128, %v1127, 0
        %v1130 = vshrl.u32 %v1129, 5
        %v1131 = vand.u32 %v1129, 31
        %v1132 = vsub.s32 32, %v1131
        %v1133 = vshrl.u32 683565275, %v1132
        %v1134 = vshll.u32 683565275, %v1131
        %v1135 = vshrl.u32 2475754826, %v1132
        %v1136 = vor.u32 %v1134, %v1135
        %v1137 = vshll.u32 2475754826, %v1131
        %v1138 = vshrl.u32 2131351028, %v1132
        %v1139 = vor.u32 %v1137, %v1138
        %v1140 = vshll.u32 2131351028, %v1131
        %v1141 = vshrl.u32 2102212464, %v1132
        %v1142 = vor.u32 %v1140, %v1141
        %v1143 = vshll.u32 2102212464, %v1131
        %v1144 = vshrl.u32 920167782, %v1132
        %v1145 = vor.u32 %v1143, %v1144
        %v1146 = vshll.u32 920167782, %v1131
        %v1147 = vshrl.u32 1326507024, %v1132
        %v1148 = vor.u32 %v1146, %v1147
        %vm1149 = vcmp.lt.s32.totalorder %v1130, 1
        %vm1150 = vcmp.lt.s32.totalorder %v1130, 2
        %vm1151 = vcmp.lt.s32.totalorder %v1130, 3
        %vm1152 = vcmp.lt.s32.totalorder %v1130, 4
        %v1153 = vsel %vm1149, %v1133, %v1136
        %v1154 = vsel %vm1152, %v1142, 2102212464
        %v1155 = vsel %vm1151, %v1139, %v1154
        %v1156 = vsel %vm1150, %v1153, %v1155
        %v1157 = vsel %vm1149, %v1136, %v1139
        %v1158 = vsel %vm1152, %v1145, 920167782
        %v1159 = vsel %vm1151, %v1142, %v1158
        %v1160 = vsel %vm1150, %v1157, %v1159
        %v1161 = vsel %vm1149, %v1139, %v1142
        %v1162 = vsel %vm1152, %v1148, 1326507024
        %v1163 = vsel %vm1151, %v1145, %v1162
        %v1164 = vsel %vm1150, %v1161, %v1163
        %v1165 = vshll.u32 %v1125, 8
        %v1166 = vmul.u32.u64.compose %v1165, %v1164
        %v1167 = vextract.low.u32 %v1166
        %v1168 = vextract.high.u32 %v1166
        %v1169 = vmul.u32.u64.compose %v1165, %v1160
        %v1170 = vextract.low.u32 %v1169
        %v1171 = vextract.high.u32 %v1169
        %v1172 = vmul.u32 %v1165, %v1156
        %v1173 = vadd.s32 %v1168, %v1170
        %vm1174 = vc.u32 %v1168, %v1170
        %v1175 = vadd.s32 %v1171, 1
        %v1176 = vsel %vm1174, %v1175, %v1171
        %v1177 = vadd.s32 %v1172, %v1176
        %v1178 = vadd.s32 %v1177, 536870912
        %v1179 = vshrl.u32 %v1178, 30
        %v1180 = vshll.u32 %v1179, 30
        %v1181 = vsub.s32 %v1177, %v1180
        %vm1182 = vcmp.lt.s32.totalorder %v1181, 0
        %v1183 = vsub.s32 0, %v1181
        %v1184 = vsel %vm1182, %v1183, %v1181
        %v1185 = vclz %v1184
        %v1186 = vsub.s32 %v1185, 2
        %vm1187 = vcmp.gt.s32.totalorder 0, %v1186
        %v1188 = vsel %vm1187, 0, %v1186
        %v1189 = vsub.s32 32, %v1188
        %v1190 = vshll.u32 %v1181, %v1188
        %v1191 = vshrl.u32 %v1173, %v1189
        %v1192 = vor.u32 %v1190, %v1191
        %v1193 = vsub.s32 4294967266, %v1188
        %v1194 = vadd.s32 %v1193, 127
        %v1195 = vshll.u32 %v1194, 23
        %v1196 = vor.u32 4788187, %v1195
        %v1197 = vand.u32 2147483647, %v1196
        %v1199 = vcvt.s32.f32 %v1192
        %v1200 = vmul.f32 %v1199, %v1197
        %v1201 = vxor.u32 %v1200, 2147483648
        %v1202 = vsel %vm1119, %v1201, %v1200
        %v1203 = vsub.s32 4, %v1179
        %v1204 = vsel %vm1119, %v1203, %v1179
        %v1205 = vsel %vm1118, %v388, %v1202
        %v1206 = vsel %vm1118, 0, %v1204
        %v1207 = vcosq.f32.pop %v1205
        %v1208 = vsinq.f32.pop %v1205
        %vm1209 = vweird.f32 %v388
        %v1210 = vadd.s32 %v1206, 3
        %v1211 = vand.u32 %v1210, 3
        %vm1212 = vcmp.lt.s32.totalorder %v1211, 2
        %vm1213 = vcmp.eq.s32.totalorder %v1211, 0
        %v1214 = vxor.u32 %v1208, 2147483648
        %v1215 = vsel %vm1213, %v1207, %v1214
        %vm1216 = vcmp.eq.s32.totalorder %v1211, 2
        %v1217 = vxor.u32 %v1207, 2147483648
        %v1218 = vsel %vm1216, %v1217, %v1208
        %v1219 = vsel %vm1212, %v1215, %v1218
        %v1220 = vsel %vm1209, nan, %v1219
        %1221 = vst [vmem:[%s164] sm:$0xff] %v492
        %1222 = vst [vmem:[%s164 + $0x8] sm:$0xff] %v596
        %1223 = vst [vmem:[%s164 + $0x10] sm:$0xff] %v700
        %1224 = vst [vmem:[%s164 + $0x18] sm:$0xff] %v804
        %1225 = vst [vmem:[%s164 + $0x20] sm:$0xff] %v908
        %1226 = vst [vmem:[%s164 + $0x28] sm:$0xff] %v1012
        %1227 = vst [vmem:[%s164 + $0x30] sm:$0xff] %v1116
        %1228 = vst [vmem:[%s164 + $0x38] sm:$0xff] %v1220
        %s1229 = sand.u32 %s93, 1
        %s1230 = scalar_lea.sflag [#allocation3], %s1229
        %s1231 = sand.u32 %s93, 1
        %s1232 = smul.addr %s1231, 64
        %s1233 = scalar_lea.vmem [#allocation2], %s1232
        // Predicated region
        $region33: #{tpu_custom_call.1} parent=31 // pred_check
          %p1234 = pneg %p103
        $region34: #{tpu_custom_call.1} parent=31 // pred_check_branch
          %1236 = sbr.rel (%p1234) target = $region36
        $region35: #{tpu_custom_call.1} parent=31 // pred_region
          %s1237 = smul.u32 8, %s17
          %s1239 = ssub.s32 1024, 1024
          %1240 = vsyncadd %s1230, %s1239
          %s1241 = smul.addr %s1237, 128
          %s1242 = scalar_lea.hbm %s3, %s1241
          %s1243 = sshll.u32 %s1233, 4
          %s1244 = int_to_ptr.vmem [resolvable:$true] %s1243
          %1249 = dma.vmem_to_hbm [thread:$0]  %s1244, 1024, %s1242, %s1230, 128, 128, 8
        $region36: #{tpu_custom_call.1} parent=31 // pred_fallthru
          _
      $region32: #{tpu_custom_call.1} parent=5 // pred_fallthru
        _
      %p1250 = scmp.le.s32.totalorder 2, %s12
      // Predicated region
      $region37: #{tpu_custom_call.1} parent=5 // pred_check
        %p1251 = pneg %p1250
      $region38: #{tpu_custom_call.1} parent=5 // pred_check_branch
        %1253 = sbr.rel (%p1251) target = $region40
      $region39: #{tpu_custom_call.1} parent=5 // pred_region
        %s1254 = ssub.s32 %s12, 2
        // Predicated region
        $region41: #{tpu_custom_call.1} parent=39 // pred_check
          %p1255 = pneg %p109
        $region42: #{tpu_custom_call.1} parent=39 // pred_check_branch
          %1257 = sbr.rel (%p1255) target = $region44
        $region43: #{tpu_custom_call.1} parent=39 // pred_region
          %s1258 = sand.u32 %s94, 1
          %s1259 = scalar_lea.sflag [#allocation3], %s1258
          %s1260 = sand.u32 %s94, 1
          %s1261 = smul.addr %s1260, 64
          %s1262 = scalar_lea.vmem [#allocation2], %s1261
          %1263 = dma.done %s1259, 1024
        $region44: #{tpu_custom_call.1} parent=39 // pred_fallthru
          _
      $region40: #{tpu_custom_call.1} parent=5 // pred_fallthru
        _
    $region6: #{tpu_custom_call.1} parent=1 // loop_footer
      %s16 = sadd.s32 1, %s12
    $region7: #{tpu_custom_call.1} parent=1 // loop_footer_branch
      %11 = sbr.rel target = $region3
    $region8: #{tpu_custom_call.1} parent=1 // loop_exit
      _
    %1264 = vsyncpa [#allocation3], 1
    %s1265 = scalar_lea.sflag [#allocation3], 1
    %1266 = vsyncpa %s1265, 1

</llo_original>
